<compile_context>
chip_gen: v7x
topology: tpu7x:2x2x1
jax: 0.10.0
libtpu: 0.0.40
codegen_flags: <defaults>
</compile_context>

<pallas_src>
import functools

import jax
import jax.numpy as jnp
from jax.experimental import pallas as pl
from jax.experimental.pallas import tpu as pltpu

_LANES = 128
_SUBLANES = 8
_MAX_BLOCK_ROWS = 4096   # 4096 * 128 * 4 B = 2 MiB per f32 input block


def _sublane_align(dtype) -> int:
    """Sublane (second-minor) tile granularity for a dtype: 8/16/32 for 4/2/1-byte."""
    itemsize = jnp.dtype(dtype).itemsize
    return _SUBLANES * max(1, 4 // itemsize)


def _dice_partial_kernel(x_ref, t_ref, out_ref, *, block_rows: int, chunk_rows: int):
    """Fused per-block partial sums for the Dice loss.

    x_ref   : (block_rows, 128) logits tile (original dtype, cast to f32 on load).
    t_ref   : (block_rows, 128) targets tile (f32 / bf16 / int8, cast on load).
    out_ref : (1, 3, 8, 128) partials [sum(sig(x)*t), sum(sig(x)), sum(t)].
    """
    n_chunks = block_rows // chunk_rows

    def reduce_rows(v):
        # Reduce only the leading (vreg-index) axis: pure VPU adds, no XLU work.
        return jnp.sum(v.reshape(-1, _SUBLANES, _LANES), axis=0)

    def body(i, carry):
        acc_p, acc_s, acc_t = carry
        r = pl.multiple_of(i * chunk_rows, chunk_rows)
        x = x_ref[pl.ds(r, chunk_rows), :].astype(jnp.float32)
        t = t_ref[pl.ds(r, chunk_rows), :].astype(jnp.float32)
        # sigmoid(x) = 0.5 * tanh(x / 2) + 0.5 : single EUP op, no VALU divide.
        s = 0.5 * jnp.tanh(0.5 * x) + 0.5
        return (acc_p + reduce_rows(s * t),
                acc_s + reduce_rows(s),
                acc_t + reduce_rows(t))

    unroll = 1
    for u in (8, 4, 2):
        if n_chunks >= u and n_chunks % u == 0:
            unroll = u
            break

    zero = jnp.zeros((_SUBLANES, _LANES), jnp.float32)
    acc_p, acc_s, acc_t = jax.lax.fori_loop(
        0, n_chunks, body, (zero, zero, zero), unroll=unroll)

    out_ref[0, 0] = acc_p
    out_ref[0, 1] = acc_s
    out_ref[0, 2] = acc_t


def _pick_block_rows(rows_aligned: int, row_align: int) -> int:
    """Largest multiple of row_align dividing rows_aligned, <= _MAX_BLOCK_ROWS,
    preferring >= 2 blocks so the 'parallel' grid axis can use both v7x cores."""
    max_br = min(_MAX_BLOCK_ROWS, rows_aligned)
    if rows_aligned >= 2 * row_align:            # enough data for two blocks
        max_br = min(max_br, rows_aligned // 2)
    max_br -= max_br % row_align
    block_rows = row_align
    for br in range(max_br, 0, -row_align):
        if rows_aligned % br == 0:
            block_rows = br
            break
    # Pathological sizes (rows_aligned/row_align a large prime): fall back to a
    # near-even split; the (< one block) leftover is reduced in the JAX tail.
    if block_rows < 256 and rows_aligned > 2 * _MAX_BLOCK_ROWS:
        nb = -(-rows_aligned // _MAX_BLOCK_ROWS)
        block_rows = max(row_align, (rows_aligned // nb) // row_align * row_align)
    return block_rows


def dice_loss(inputs: jax.Array, targets: jax.Array, smooth: float = 1.0) -> jax.Array:
    """Pallas TPU implementation of DiceLoss.forward. Returns a scalar f32."""
    n = int(inputs.size)
    x = inputs.reshape(-1)
    t = targets.reshape(-1)
    if t.dtype == jnp.bool_:
        # Keep the target HBM stream at 1 B/elem; the f32 upcast happens in-kernel.
        t = t.astype(jnp.int8)

    inter = jnp.float32(0.0)
    s_sum = jnp.float32(0.0)
    t_sum = jnp.float32(0.0)

    row_align = max(_sublane_align(x.dtype), _sublane_align(t.dtype))
    rows_aligned = (n // (row_align * _LANES)) * row_align
    n_kernel = 0

    if rows_aligned > 0:
        block_rows = _pick_block_rows(rows_aligned, row_align)
        num_blocks = rows_aligned // block_rows
        n_kernel = num_blocks * block_rows * _LANES

        xk = x[:n_kernel].reshape(num_blocks * block_rows, _LANES)
        tk = t[:n_kernel].reshape(num_blocks * block_rows, _LANES)

        in_block_bytes = block_rows * _LANES * (xk.dtype.itemsize + tk.dtype.itemsize)
        vmem_limit = int(min(96 << 20, max(16 << 20, 2 * in_block_bytes + (8 << 20))))

        kernel = functools.partial(
            _dice_partial_kernel, block_rows=block_rows, chunk_rows=row_align)

        partials = pl.pallas_call(
            kernel,
            out_shape=jax.ShapeDtypeStruct(
                (num_blocks, 3, _SUBLANES, _LANES), jnp.float32),
            grid_spec=pltpu.PrefetchScalarGridSpec(
                num_scalar_prefetch=0,
                grid=(num_blocks,),
                in_specs=[
                    pl.BlockSpec((block_rows, _LANES), lambda i: (i, 0)),
                    pl.BlockSpec((block_rows, _LANES), lambda i: (i, 0)),
                ],
                out_specs=pl.BlockSpec(
                    (1, 3, _SUBLANES, _LANES), lambda i: (i, 0, 0, 0)),
            ),
            compiler_params=pltpu.CompilerParams(
                # Blocks are independent -> on v7x the stream is sharded across
                # both TensorCores; a no-op on v5e/v6e.
                dimension_semantics=("parallel",),
                vmem_limit_bytes=vmem_limit,
            ),
        )(xk, tk)

        sums = jnp.sum(partials, axis=(0, 2, 3))          # (3,)
        inter, s_sum, t_sum = sums[0], sums[1], sums[2]

    if n_kernel < n:
        # Ragged tail (< one block): reduce in plain JAX — no pad copy, no masking.
        xt = x[n_kernel:].astype(jnp.float32)
        tt = t[n_kernel:].astype(jnp.float32)
        st = jax.nn.sigmoid(xt)
        inter = inter + jnp.sum(st * tt)
        s_sum = s_sum + jnp.sum(st)
        t_sum = t_sum + jnp.sum(tt)

    smooth = jnp.float32(smooth)
    dice = (2.0 * inter + smooth) / (s_sum + t_sum + smooth)
    return (1.0 - dice).astype(jnp.float32)


def _dice_loss_ref(inputs, targets, smooth=1.0):
    s = jax.nn.sigmoid(inputs.reshape(-1).astype(jnp.float32))
    t = targets.reshape(-1).astype(jnp.float32)
    inter = jnp.sum(s * t)
    dice = (2.0 * inter + smooth) / (jnp.sum(s) + jnp.sum(t) + smooth)
    return 1.0 - dice


if __name__ == "__main__":
    key = jax.random.PRNGKey(0)
    k1, k2, k3, k4 = jax.random.split(key, 4)

    # 1) Aligned NCHW logits + f32 binary mask: 2-block kernel path, no tail.
    x1 = jax.random.normal(k1, (2, 4, 32, 32), dtype=jnp.float32)
    t1 = (jax.random.uniform(k2, (2, 4, 32, 32)) > 0.5).astype(jnp.float32)
    out1 = dice_loss(x1, t1, smooth=1.0)
    jax.block_until_ready(out1)
    ref1 = _dice_loss_ref(x1, t1, 1.0)
    assert jnp.allclose(out1, ref1, atol=1e-4, rtol=1e-4), (out1, ref1)

    # 2) Unaligned size + bool targets: int8 target stream in the kernel + JAX tail.
    x2 = jax.random.normal(k3, (2, 4, 30, 30), dtype=jnp.float32)
    t2 = jax.random.uniform(k4, (2, 4, 30, 30)) > 0.5
    out2 = dice_loss(x2, t2, smooth=1.0)
    jax.block_until_ready(out2)
    ref2 = _dice_loss_ref(x2, t2, 1.0)
    assert jnp.allclose(out2, ref2, atol=1e-4, rtol=1e-4), (out2, ref2)

    # 3) Tiny tensor (< one aligned block): pure-JAX tail path.
    x3 = jax.random.normal(k1, (3, 5, 7, 9), dtype=jnp.float32)
    t3 = (jax.random.uniform(k2, (3, 5, 7, 9)) > 0.5).astype(jnp.float32)
    out3 = dice_loss(x3, t3, smooth=1.0)
    jax.block_until_ready(out3)
    ref3 = _dice_loss_ref(x3, t3, 1.0)
    assert jnp.allclose(out3, ref3, atol=1e-4, rtol=1e-4), (out3, ref3)

    print("KERNEL_OK")
</pallas_src>

<mosaic_0001>
module attributes {stable_mosaic.version = 11 : i64} {
  func.func @_dice_partial_kernel(%arg0: i32, %arg1: memref<32x128xf32, #tpu.memory_space<vmem>>, %arg2: memref<32x128xf32, #tpu.memory_space<vmem>>, %arg3: memref<1x3x8x128xf32, #tpu.memory_space<vmem>>) attributes {dimension_semantics = [#tpu.dimension_semantics<parallel>], iteration_bounds = array<i64: 2>, scalar_prefetch = 0 : i64, scratch_operands = 0 : i64, tpu.core_type = #tpu.core_type<tc>, window_params = [{transform_indices = @transform_0, window_bounds = array<i64: 32, 128>}, {transform_indices = @transform_1, window_bounds = array<i64: 32, 128>}, {transform_indices = @transform_2, window_bounds = array<i64: 1, 3, 8, 128>}]} {
    %cst = arith.constant 0.000000e+00 : f32
    %0 = vector.broadcast %cst : f32 to vector<8x128xf32>
    %c0_i32 = arith.constant 0 : i32
    %c8_i32 = arith.constant 8 : i32
    %1 = arith.muli %c0_i32, %c8_i32 : i32
    %2 = tpu.assume_multiple %1, 8 : i32
    %3 = arith.index_cast %2 : i32 to index
    %c0 = arith.constant 0 : index
    %4 = vector.load %arg1[%3, %c0] : memref<32x128xf32, #tpu.memory_space<vmem>>, vector<8x128xf32>
    %5 = arith.index_cast %2 : i32 to index
    %c0_0 = arith.constant 0 : index
    %6 = vector.load %arg2[%5, %c0_0] : memref<32x128xf32, #tpu.memory_space<vmem>>, vector<8x128xf32>
    %cst_1 = arith.constant 5.000000e-01 : f32
    %7 = vector.broadcast %cst_1 : f32 to vector<8x128xf32>
    %8 = arith.mulf %7, %4 : vector<8x128xf32>
    %9 = math.tanh %8 : vector<8x128xf32>
    %cst_2 = arith.constant 5.000000e-01 : f32
    %10 = vector.broadcast %cst_2 : f32 to vector<8x128xf32>
    %11 = arith.mulf %10, %9 : vector<8x128xf32>
    %cst_3 = arith.constant 5.000000e-01 : f32
    %12 = vector.broadcast %cst_3 : f32 to vector<8x128xf32>
    %13 = arith.addf %11, %12 : vector<8x128xf32>
    %14 = arith.mulf %13, %6 : vector<8x128xf32>
    %15 = vector.shape_cast %14 : vector<8x128xf32> to vector<1x8x128xf32>
    %cst_4 = arith.constant dense<0.000000e+00> : vector<8x128xf32>
    %16 = vector.multi_reduction <add>, %15, %cst_4 [0] : vector<1x8x128xf32> to vector<8x128xf32>
    %17 = arith.addf %0, %16 : vector<8x128xf32>
    %18 = vector.shape_cast %13 : vector<8x128xf32> to vector<1x8x128xf32>
    %cst_5 = arith.constant dense<0.000000e+00> : vector<8x128xf32>
    %19 = vector.multi_reduction <add>, %18, %cst_5 [0] : vector<1x8x128xf32> to vector<8x128xf32>
    %20 = arith.addf %0, %19 : vector<8x128xf32>
    %21 = vector.shape_cast %6 : vector<8x128xf32> to vector<1x8x128xf32>
    %cst_6 = arith.constant dense<0.000000e+00> : vector<8x128xf32>
    %22 = vector.multi_reduction <add>, %21, %cst_6 [0] : vector<1x8x128xf32> to vector<8x128xf32>
    %23 = arith.addf %0, %22 : vector<8x128xf32>
    %c1_i32 = arith.constant 1 : i32
    %c8_i32_7 = arith.constant 8 : i32
    %24 = arith.muli %c1_i32, %c8_i32_7 : i32
    %25 = tpu.assume_multiple %24, 8 : i32
    %26 = arith.index_cast %25 : i32 to index
    %c0_8 = arith.constant 0 : index
    %27 = vector.load %arg1[%26, %c0_8] : memref<32x128xf32, #tpu.memory_space<vmem>>, vector<8x128xf32>
    %28 = arith.index_cast %25 : i32 to index
    %c0_9 = arith.constant 0 : index
    %29 = vector.load %arg2[%28, %c0_9] : memref<32x128xf32, #tpu.memory_space<vmem>>, vector<8x128xf32>
    %cst_10 = arith.constant 5.000000e-01 : f32
    %30 = vector.broadcast %cst_10 : f32 to vector<8x128xf32>
    %31 = arith.mulf %30, %27 : vector<8x128xf32>
    %32 = math.tanh %31 : vector<8x128xf32>
    %cst_11 = arith.constant 5.000000e-01 : f32
    %33 = vector.broadcast %cst_11 : f32 to vector<8x128xf32>
    %34 = arith.mulf %33, %32 : vector<8x128xf32>
    %cst_12 = arith.constant 5.000000e-01 : f32
    %35 = vector.broadcast %cst_12 : f32 to vector<8x128xf32>
    %36 = arith.addf %34, %35 : vector<8x128xf32>
    %37 = arith.mulf %36, %29 : vector<8x128xf32>
    %38 = vector.shape_cast %37 : vector<8x128xf32> to vector<1x8x128xf32>
    %cst_13 = arith.constant dense<0.000000e+00> : vector<8x128xf32>
    %39 = vector.multi_reduction <add>, %38, %cst_13 [0] : vector<1x8x128xf32> to vector<8x128xf32>
    %40 = arith.addf %17, %39 : vector<8x128xf32>
    %41 = vector.shape_cast %36 : vector<8x128xf32> to vector<1x8x128xf32>
    %cst_14 = arith.constant dense<0.000000e+00> : vector<8x128xf32>
    %42 = vector.multi_reduction <add>, %41, %cst_14 [0] : vector<1x8x128xf32> to vector<8x128xf32>
    %43 = arith.addf %20, %42 : vector<8x128xf32>
    %44 = vector.shape_cast %29 : vector<8x128xf32> to vector<1x8x128xf32>
    %cst_15 = arith.constant dense<0.000000e+00> : vector<8x128xf32>
    %45 = vector.multi_reduction <add>, %44, %cst_15 [0] : vector<1x8x128xf32> to vector<8x128xf32>
    %46 = arith.addf %23, %45 : vector<8x128xf32>
    %c2_i32 = arith.constant 2 : i32
    %c8_i32_16 = arith.constant 8 : i32
    %47 = arith.muli %c2_i32, %c8_i32_16 : i32
    %48 = tpu.assume_multiple %47, 8 : i32
    %49 = arith.index_cast %48 : i32 to index
    %c0_17 = arith.constant 0 : index
    %50 = vector.load %arg1[%49, %c0_17] : memref<32x128xf32, #tpu.memory_space<vmem>>, vector<8x128xf32>
    %51 = arith.index_cast %48 : i32 to index
    %c0_18 = arith.constant 0 : index
    %52 = vector.load %arg2[%51, %c0_18] : memref<32x128xf32, #tpu.memory_space<vmem>>, vector<8x128xf32>
    %cst_19 = arith.constant 5.000000e-01 : f32
    %53 = vector.broadcast %cst_19 : f32 to vector<8x128xf32>
    %54 = arith.mulf %53, %50 : vector<8x128xf32>
    %55 = math.tanh %54 : vector<8x128xf32>
    %cst_20 = arith.constant 5.000000e-01 : f32
    %56 = vector.broadcast %cst_20 : f32 to vector<8x128xf32>
    %57 = arith.mulf %56, %55 : vector<8x128xf32>
    %cst_21 = arith.constant 5.000000e-01 : f32
    %58 = vector.broadcast %cst_21 : f32 to vector<8x128xf32>
    %59 = arith.addf %57, %58 : vector<8x128xf32>
    %60 = arith.mulf %59, %52 : vector<8x128xf32>
    %61 = vector.shape_cast %60 : vector<8x128xf32> to vector<1x8x128xf32>
    %cst_22 = arith.constant dense<0.000000e+00> : vector<8x128xf32>
    %62 = vector.multi_reduction <add>, %61, %cst_22 [0] : vector<1x8x128xf32> to vector<8x128xf32>
    %63 = arith.addf %40, %62 : vector<8x128xf32>
    %64 = vector.shape_cast %59 : vector<8x128xf32> to vector<1x8x128xf32>
    %cst_23 = arith.constant dense<0.000000e+00> : vector<8x128xf32>
    %65 = vector.multi_reduction <add>, %64, %cst_23 [0] : vector<1x8x128xf32> to vector<8x128xf32>
    %66 = arith.addf %43, %65 : vector<8x128xf32>
    %67 = vector.shape_cast %52 : vector<8x128xf32> to vector<1x8x128xf32>
    %cst_24 = arith.constant dense<0.000000e+00> : vector<8x128xf32>
    %68 = vector.multi_reduction <add>, %67, %cst_24 [0] : vector<1x8x128xf32> to vector<8x128xf32>
    %69 = arith.addf %46, %68 : vector<8x128xf32>
    %c3_i32 = arith.constant 3 : i32
    %c8_i32_25 = arith.constant 8 : i32
    %70 = arith.muli %c3_i32, %c8_i32_25 : i32
    %71 = tpu.assume_multiple %70, 8 : i32
    %72 = arith.index_cast %71 : i32 to index
    %c0_26 = arith.constant 0 : index
    %73 = vector.load %arg1[%72, %c0_26] : memref<32x128xf32, #tpu.memory_space<vmem>>, vector<8x128xf32>
    %74 = arith.index_cast %71 : i32 to index
    %c0_27 = arith.constant 0 : index
    %75 = vector.load %arg2[%74, %c0_27] : memref<32x128xf32, #tpu.memory_space<vmem>>, vector<8x128xf32>
    %cst_28 = arith.constant 5.000000e-01 : f32
    %76 = vector.broadcast %cst_28 : f32 to vector<8x128xf32>
    %77 = arith.mulf %76, %73 : vector<8x128xf32>
    %78 = math.tanh %77 : vector<8x128xf32>
    %cst_29 = arith.constant 5.000000e-01 : f32
    %79 = vector.broadcast %cst_29 : f32 to vector<8x128xf32>
    %80 = arith.mulf %79, %78 : vector<8x128xf32>
    %cst_30 = arith.constant 5.000000e-01 : f32
    %81 = vector.broadcast %cst_30 : f32 to vector<8x128xf32>
    %82 = arith.addf %80, %81 : vector<8x128xf32>
    %83 = arith.mulf %82, %75 : vector<8x128xf32>
    %84 = vector.shape_cast %83 : vector<8x128xf32> to vector<1x8x128xf32>
    %cst_31 = arith.constant dense<0.000000e+00> : vector<8x128xf32>
    %85 = vector.multi_reduction <add>, %84, %cst_31 [0] : vector<1x8x128xf32> to vector<8x128xf32>
    %86 = arith.addf %63, %85 : vector<8x128xf32>
    %87 = vector.shape_cast %82 : vector<8x128xf32> to vector<1x8x128xf32>
    %cst_32 = arith.constant dense<0.000000e+00> : vector<8x128xf32>
    %88 = vector.multi_reduction <add>, %87, %cst_32 [0] : vector<1x8x128xf32> to vector<8x128xf32>
    %89 = arith.addf %66, %88 : vector<8x128xf32>
    %90 = vector.shape_cast %75 : vector<8x128xf32> to vector<1x8x128xf32>
    %cst_33 = arith.constant dense<0.000000e+00> : vector<8x128xf32>
    %91 = vector.multi_reduction <add>, %90, %cst_33 [0] : vector<1x8x128xf32> to vector<8x128xf32>
    %92 = arith.addf %69, %91 : vector<8x128xf32>
    %c4_i32 = arith.constant 4 : i32
    %c0_34 = arith.constant 0 : index
    %c0_35 = arith.constant 0 : index
    %c0_36 = arith.constant 0 : index
    %c0_37 = arith.constant 0 : index
    %93 = vector.load %arg3[%c0_34, %c0_35, %c0_36, %c0_37] : memref<1x3x8x128xf32, #tpu.memory_space<vmem>>, vector<1x1x8x128xf32>
    %94 = vector.shape_cast %93 : vector<1x1x8x128xf32> to vector<8x128xf32>
    %95 = vector.shape_cast %86 : vector<8x128xf32> to vector<1x1x8x128xf32>
    tpu.vector_store %arg3[%c0_34, %c0_35, %c0_36, %c0_37], %95 {strides = array<i32>} : memref<1x3x8x128xf32, #tpu.memory_space<vmem>>, vector<1x1x8x128xf32>,
    %c0_38 = arith.constant 0 : index
    %c1 = arith.constant 1 : index
    %c0_39 = arith.constant 0 : index
    %c0_40 = arith.constant 0 : index
    %96 = vector.load %arg3[%c0_38, %c1, %c0_39, %c0_40] : memref<1x3x8x128xf32, #tpu.memory_space<vmem>>, vector<1x1x8x128xf32>
    %97 = vector.shape_cast %96 : vector<1x1x8x128xf32> to vector<8x128xf32>
    %98 = vector.shape_cast %89 : vector<8x128xf32> to vector<1x1x8x128xf32>
    tpu.vector_store %arg3[%c0_38, %c1, %c0_39, %c0_40], %98 {strides = array<i32>} : memref<1x3x8x128xf32, #tpu.memory_space<vmem>>, vector<1x1x8x128xf32>,
    %c0_41 = arith.constant 0 : index
    %c2 = arith.constant 2 : index
    %c0_42 = arith.constant 0 : index
    %c0_43 = arith.constant 0 : index
    %99 = vector.load %arg3[%c0_41, %c2, %c0_42, %c0_43] : memref<1x3x8x128xf32, #tpu.memory_space<vmem>>, vector<1x1x8x128xf32>
    %100 = vector.shape_cast %99 : vector<1x1x8x128xf32> to vector<8x128xf32>
    %101 = vector.shape_cast %92 : vector<8x128xf32> to vector<1x1x8x128xf32>
    tpu.vector_store %arg3[%c0_41, %c2, %c0_42, %c0_43], %101 {strides = array<i32>} : memref<1x3x8x128xf32, #tpu.memory_space<vmem>>, vector<1x1x8x128xf32>,
    return
  }
  func.func @transform_0(%arg0: i32) -> (i32, i32) {
    %c0_i32 = arith.constant 0 : i32
    %c0_i32_0 = arith.constant 0 : i32
    return %arg0, %c0_i32 : i32, i32
  }
  func.func @transform_1(%arg0: i32) -> (i32, i32) {
    %c0_i32 = arith.constant 0 : i32
    %c0_i32_0 = arith.constant 0 : i32
    return %arg0, %c0_i32 : i32, i32
  }
  func.func @transform_2(%arg0: i32) -> (i32, i32, i32, i32) {
    %c0_i32 = arith.constant 0 : i32
    %c0_i32_0 = arith.constant 0 : i32
    %c0_i32_1 = arith.constant 0 : i32
    %c0_i32_2 = arith.constant 0 : i32
    return %arg0, %c0_i32, %c0_i32_0, %c0_i32_1 : i32, i32, i32, i32
  }
}

</mosaic_0001>

<llo_original>
// kernel: tpu_custom_call.1
$region0: #{tpu_custom_call.1}
  #allocation0 [shape = 'u32[]', space=smem, size = 0x4, offset = 0x4, fixed_abs, tag = 'smem constant byte address 0x4 - core index']
  #allocation1 [shape = 'u32[144,128]{1,0:T(1,128)}', space=vmem, size = 0x12000, scoped, tag = 'internal scratch']
  %s0 = inlined_call_operand.hbm [shape: f32[64,128], index: 0, kind: input, shape index: {}]
  %s1 = inlined_call_operand.hbm [shape: f32[64,128], index: 1, kind: input, shape index: {}]
  %s2 = inlined_call_operand.hbm [shape: f32[2,3,8,128], index: 2, kind: output, shape index: {}]
  %s3 = sld [smem:[#allocation0]]
  $region49: #{tpu_custom_call.1} parent=0
    _
  %s5 = ssub.s32 1, %s3
  %s6 = scalar_select 0, %s5, %s3
  $region1: #{tpu_custom_call.1} parent=0
    #allocation2 [shape = 'u8[32768]{0}', space=vmem, size = 0x8000, scoped, tag = 'input window, operand 0']
    #allocation3 [shape = 's32[2]{0}', space=sflag, size = 0x8, scoped, tag = 'scoped memory for tpu_custom_call.1']
    #allocation4 [shape = 's32[2]{0}', space=sflag, size = 0x8, scoped, tag = 'scoped memory for tpu_custom_call.1']
    #allocation5 [shape = 'u8[32768]{0}', space=vmem, size = 0x8000, scoped, tag = 'input window, operand 1']
    #allocation6 [shape = 's32[2]{0}', space=sflag, size = 0x8, scoped, tag = 'scoped memory for tpu_custom_call.1']
    #allocation7 [shape = 'u8[24576]{0}', space=vmem, size = 0x6000, scoped, tag = 'output window, operand 0']
    %7 = vsyncpa [#allocation3], 0
    %s8 = scalar_lea.sflag [#allocation3], 1
    %9 = vsyncpa %s8, 0
    %10 = vsyncpa [#allocation6], 0
    %s11 = scalar_lea.sflag [#allocation6], 1
    %12 = vsyncpa %s11, 0
    %13 = vsyncpa [#allocation4], 0
    %s14 = scalar_lea.sflag [#allocation4], 1
    %15 = vsyncpa %s14, 0
    loop: start=0, step=1, limit=4
    $region2: #{tpu_custom_call.1} parent=1 // loop_pre_header
      _
    $region3: #{tpu_custom_call.1} parent=1 // loop_header
      %s17 = sphi 0, %s21
      %p18 = scmp.ge.s32.totalorder %s17, 4
      %s27 = sphi 0, %s29
      %s30 = sphi 0, %s27
      %s31 = sphi 0, %s30
      %s47 = sphi 0, %s31
      %s53 = sphi 0, %s55
      %s56 = sphi 0, %s53
      %s57 = sphi 0, %s56
      %s73 = sphi 0, %s57
      %s79 = sphi 0, %s81
      %s82 = sphi 0, %s79
      %s83 = sphi 0, %s82
      %s99 = sphi 0, %s83
    $region4: #{tpu_custom_call.1} parent=1 // loop_header_branch
      %20 = sbr.rel (%p18) target = $region8
    $region5: #{tpu_custom_call.1} parent=1 // loop_body
      %s22 = ssub.s32 %s17, 1
      %s23 = ssub.s32 %s17, 2
      %s24 = sadd.s32 %s17, 1
      %s25 = ssub.s32 %s17, %s24
      %p26 = scmp.eq.s32.totalorder %s25, 0
      %s28 = sadd.s32 %s27, 1
      %s29 = scalar_select %p26, %s27, %s28
      %p32 = pneg %p26
      %p33 = scmp.eq.s32.totalorder %s17, 1
      %p34 = por %p32, %p33
      %p35 = scmp.ne.s32.totalorder %s27, %s30
      %p36 = scmp.eq.s32.totalorder %s17, 0
      %p37 = por %p35, %p36
      %p38 = scmp.ne.s32.totalorder %s27, %s30
      %p39 = scmp.eq.s32.totalorder %s22, 1
      %p40 = por %p38, %p39
      %p41 = scmp.ne.s32.totalorder %s30, %s31
      %p42 = scmp.eq.s32.totalorder %s22, 0
      %p43 = por %p41, %p42
      %p44 = scmp.ne.s32.totalorder %s30, %s31
      %p45 = scmp.eq.s32.totalorder %s23, 1
      %p46 = por %p44, %p45
      %p48 = scmp.ne.s32.totalorder %s31, %s47
      %p49 = scmp.eq.s32.totalorder %s23, 0
      %p50 = por %p48, %p49
      %s51 = ssub.s32 %s17, %s24
      %p52 = scmp.eq.s32.totalorder %s51, 0
      %s54 = sadd.s32 %s53, 1
      %s55 = scalar_select %p52, %s53, %s54
      %p58 = pneg %p52
      %p59 = scmp.eq.s32.totalorder %s17, 1
      %p60 = por %p58, %p59
      %p61 = scmp.ne.s32.totalorder %s53, %s56
      %p62 = scmp.eq.s32.totalorder %s17, 0
      %p63 = por %p61, %p62
      %p64 = scmp.ne.s32.totalorder %s53, %s56
      %p65 = scmp.eq.s32.totalorder %s22, 1
      %p66 = por %p64, %p65
      %p67 = scmp.ne.s32.totalorder %s56, %s57
      %p68 = scmp.eq.s32.totalorder %s22, 0
      %p69 = por %p67, %p68
      %p70 = scmp.ne.s32.totalorder %s56, %s57
      %p71 = scmp.eq.s32.totalorder %s23, 1
      %p72 = por %p70, %p71
      %p74 = scmp.ne.s32.totalorder %s57, %s73
      %p75 = scmp.eq.s32.totalorder %s23, 0
      %p76 = por %p74, %p75
      %s77 = ssub.s32 %s17, %s24
      %p78 = scmp.eq.s32.totalorder %s77, 0
      %s80 = sadd.s32 %s79, 1
      %s81 = scalar_select %p78, %s79, %s80
      %p84 = pneg %p78
      %p85 = scmp.eq.s32.totalorder %s17, 1
      %p86 = por %p84, %p85
      %p87 = scmp.ne.s32.totalorder %s79, %s82
      %p88 = scmp.eq.s32.totalorder %s17, 0
      %p89 = por %p87, %p88
      %p90 = scmp.ne.s32.totalorder %s79, %s82
      %p91 = scmp.eq.s32.totalorder %s22, 1
      %p92 = por %p90, %p91
      %p93 = scmp.ne.s32.totalorder %s82, %s83
      %p94 = scmp.eq.s32.totalorder %s22, 0
      %p95 = por %p93, %p94
      %p96 = scmp.ne.s32.totalorder %s82, %s83
      %p97 = scmp.eq.s32.totalorder %s23, 1
      %p98 = por %p96, %p97
      %p100 = scmp.ne.s32.totalorder %s83, %s99
      %p101 = scmp.eq.s32.totalorder %s23, 0
      %p102 = por %p100, %p101
      %p103 = scmp.le.s32.totalorder 1, %s17
      %p104 = scmp.lt.s32.totalorder %s17, 3
      %p105 = pnand %p103, %p104
      %p106 = pneg %p105
      // Predicated region
      $region9: #{tpu_custom_call.1} parent=5 // pred_check
        _
      $region10: #{tpu_custom_call.1} parent=5 // pred_check_branch
        %108 = sbr.rel (%p105) target = $region12
      $region11: #{tpu_custom_call.1} parent=5 // pred_region
        %s109 = ssub.s32 %s17, 1
      $region12: #{tpu_custom_call.1} parent=5 // pred_fallthru
        _
      %p110 = scmp.lt.s32.totalorder %s17, 2
      // Predicated region
      $region13: #{tpu_custom_call.1} parent=5 // pred_check
        %p111 = pneg %p110
      $region14: #{tpu_custom_call.1} parent=5 // pred_check_branch
        %113 = sbr.rel (%p111) target = $region16
      $region15: #{tpu_custom_call.1} parent=5 // pred_region
        // Predicated region
        $region17: #{tpu_custom_call.1} parent=15 // pred_check
          %p114 = pneg %p37
        $region18: #{tpu_custom_call.1} parent=15 // pred_check_branch
          %116 = sbr.rel (%p114) target = $region20
        $region19: #{tpu_custom_call.1} parent=15 // pred_region
          %s117 = sand.u32 %s27, 1
          %s118 = scalar_lea.sflag [#allocation3], %s117
          %s119 = sand.u32 %s27, 1
          %s120 = smul.addr %s119, 32
          %s121 = scalar_lea.vmem [#allocation2], %s120
          %s122 = smul.u32 4, %s17
          %s124 = ssub.s32 512, 512
          %125 = vsyncadd %s118, %s124
          %s126 = smul.addr %s122, 128
          %s127 = scalar_lea.hbm %s0, %s126
          %s128 = sshll.u32 %s121, 4
          %s129 = int_to_ptr.vmem [resolvable:$true] %s128
          %134 = dma.hbm_to_vmem [thread:$0]  %s127, 512, %s129, %s118, 128, 128, 8
        $region20: #{tpu_custom_call.1} parent=15 // pred_fallthru
          _
        // Predicated region
        $region21: #{tpu_custom_call.1} parent=15 // pred_check
          %p135 = pneg %p63
        $region22: #{tpu_custom_call.1} parent=15 // pred_check_branch
          %137 = sbr.rel (%p135) target = $region24
        $region23: #{tpu_custom_call.1} parent=15 // pred_region
          %s138 = sand.u32 %s53, 1
          %s139 = scalar_lea.sflag [#allocation6], %s138
          %s140 = sand.u32 %s53, 1
          %s141 = smul.addr %s140, 32
          %s142 = scalar_lea.vmem [#allocation5], %s141
          %s143 = smul.u32 4, %s17
          %s145 = ssub.s32 512, 512
          %146 = vsyncadd %s139, %s145
          %s147 = smul.addr %s143, 128
          %s148 = scalar_lea.hbm %s1, %s147
          %s149 = sshll.u32 %s142, 4
          %s150 = int_to_ptr.vmem [resolvable:$true] %s149
          %155 = dma.hbm_to_vmem [thread:$0]  %s148, 512, %s150, %s139, 128, 128, 8
        $region24: #{tpu_custom_call.1} parent=15 // pred_fallthru
          _
      $region16: #{tpu_custom_call.1} parent=5 // pred_fallthru
        _
      %p156 = scmp.le.s32.totalorder 1, %s17
      %p157 = scmp.lt.s32.totalorder %s17, 3
      %p158 = pnand %p156, %p157
      %p159 = pneg %p158
      // Predicated region
      $region25: #{tpu_custom_call.1} parent=5 // pred_check
        _
      $region26: #{tpu_custom_call.1} parent=5 // pred_check_branch
        %161 = sbr.rel (%p158) target = $region28
      $region27: #{tpu_custom_call.1} parent=5 // pred_region
        %s162 = ssub.s32 %s17, 1
        %s163 = sand.u32 %s30, 1
        %s164 = scalar_lea.sflag [#allocation3], %s163
        %s165 = sand.u32 %s30, 1
        %s166 = smul.addr %s165, 32
        %s167 = scalar_lea.vmem [#allocation2], %s166
        // Predicated region
        $region29: #{tpu_custom_call.1} parent=27 // pred_check
          %p168 = pneg %p43
        $region30: #{tpu_custom_call.1} parent=27 // pred_check_branch
          %170 = sbr.rel (%p168) target = $region32
        $region31: #{tpu_custom_call.1} parent=27 // pred_region
          %171 = dma.done %s164, 512
        $region32: #{tpu_custom_call.1} parent=27 // pred_fallthru
          _
        %s172 = sand.u32 %s56, 1
        %s173 = scalar_lea.sflag [#allocation6], %s172
        %s174 = sand.u32 %s56, 1
        %s175 = smul.addr %s174, 32
        %s176 = scalar_lea.vmem [#allocation5], %s175
        // Predicated region
        $region33: #{tpu_custom_call.1} parent=27 // pred_check
          %p177 = pneg %p69
        $region34: #{tpu_custom_call.1} parent=27 // pred_check_branch
          %179 = sbr.rel (%p177) target = $region36
        $region35: #{tpu_custom_call.1} parent=27 // pred_region
          %180 = dma.done %s173, 512
        $region36: #{tpu_custom_call.1} parent=27 // pred_fallthru
          _
        %s181 = sand.u32 %s30, 1
        %s182 = scalar_lea.sflag [#allocation3], %s181
        %s183 = sand.u32 %s30, 1
        %s184 = smul.addr %s183, 32
        %s185 = scalar_lea.vmem [#allocation2], %s184
        %p186 = pneg %p43
        %p187 = pneg %p40
        %s188 = sand.u32 %s56, 1
        %s189 = scalar_lea.sflag [#allocation6], %s188
        %s190 = sand.u32 %s56, 1
        %s191 = smul.addr %s190, 32
        %s192 = scalar_lea.vmem [#allocation5], %s191
        %p193 = pneg %p69
        %p194 = pneg %p66
        %p195 = pneg %p95
        %p196 = pneg %p92
        %s197 = sand.u32 %s82, 1
        %s198 = scalar_lea.sflag [#allocation4], %s197
        %s199 = sand.u32 %s82, 1
        %s200 = smul.addr %s199, 24
        %s201 = scalar_lea.vmem [#allocation7], %s200
        %s202 = smul.u32 4, %s22
        %s203 = smul.u32 4, %s22
        %v204 = vld [vmem:[%s167] sm:$0xff]
        %v205 = vld [vmem:[%s176] sm:$0xff]
        %v206 = vmul.f32 %v204, 0.5
        %v207 = vtanh.pop %v206
        %v208 = vmul.f32 %v207, 0.5
        %v209 = vadd.f32 %v208, 0.5
        %v210 = vmul.f32 %v209, %v205
        %v211 = vadd.f32 %v210, 0.0
        %v212 = vadd.f32 %v211, 0.0
        %v213 = vadd.f32 %v209, 0.0
        %v214 = vadd.f32 %v213, 0.0
        %v215 = vadd.f32 %v205, 0.0
        %v216 = vadd.f32 %v215, 0.0
        %s217 = scalar_lea.vmem %s167, 8 [#allocation2]
        %v218 = vld [vmem:[%s217] sm:$0xff]
        %s219 = scalar_lea.vmem %s176, 8 [#allocation5]
        %v220 = vld [vmem:[%s219] sm:$0xff]
        %v221 = vmul.f32 %v218, 0.5
        %v222 = vtanh.pop %v221
        %v223 = vmul.f32 %v222, 0.5
        %v224 = vadd.f32 %v223, 0.5
        %v225 = vmul.f32 %v224, %v220
        %v226 = vadd.f32 %v225, 0.0
        %v227 = vadd.f32 %v212, %v226
        %v228 = vadd.f32 %v224, 0.0
        %v229 = vadd.f32 %v214, %v228
        %v230 = vadd.f32 %v220, 0.0
        %v231 = vadd.f32 %v216, %v230
        %s232 = scalar_lea.vmem %s167, 16 [#allocation2]
        %v233 = vld [vmem:[%s232] sm:$0xff]
        %s234 = scalar_lea.vmem %s176, 16 [#allocation5]
        %v235 = vld [vmem:[%s234] sm:$0xff]
        %v236 = vmul.f32 %v233, 0.5
        %v237 = vtanh.pop %v236
        %v238 = vmul.f32 %v237, 0.5
        %v239 = vadd.f32 %v238, 0.5
        %v240 = vmul.f32 %v239, %v235
        %v241 = vadd.f32 %v240, 0.0
        %v242 = vadd.f32 %v227, %v241
        %v243 = vadd.f32 %v239, 0.0
        %v244 = vadd.f32 %v229, %v243
        %v245 = vadd.f32 %v235, 0.0
        %v246 = vadd.f32 %v231, %v245
        %s247 = scalar_lea.vmem %s167, 24 [#allocation2]
        %v248 = vld [vmem:[%s247] sm:$0xff]
        %s249 = scalar_lea.vmem %s176, 24 [#allocation5]
        %v250 = vld [vmem:[%s249] sm:$0xff]
        %v251 = vmul.f32 %v248, 0.5
        %v252 = vtanh.pop %v251
        %v253 = vmul.f32 %v252, 0.5
        %v254 = vadd.f32 %v253, 0.5
        %v255 = vmul.f32 %v254, %v250
        %v256 = vadd.f32 %v255, 0.0
        %v257 = vadd.f32 %v242, %v256
        %v258 = vadd.f32 %v254, 0.0
        %v259 = vadd.f32 %v244, %v258
        %v260 = vadd.f32 %v250, 0.0
        %v261 = vadd.f32 %v246, %v260
        %262 = vst [vmem:[%s201] sm:$0xff] %v257
        %s263 = scalar_lea.vmem %s201, 8 [#allocation7]
        %264 = vst [vmem:[%s263] sm:$0xff] %v259
        %s265 = scalar_lea.vmem %s201, 16 [#allocation7]
        %266 = vst [vmem:[%s265] sm:$0xff] %v261
        %s267 = sand.u32 %s82, 1
        %s268 = scalar_lea.sflag [#allocation4], %s267
        %s269 = sand.u32 %s82, 1
        %s270 = smul.addr %s269, 24
        %s271 = scalar_lea.vmem [#allocation7], %s270
        // Predicated region
        $region37: #{tpu_custom_call.1} parent=27 // pred_check
          %p272 = pneg %p92
        $region38: #{tpu_custom_call.1} parent=27 // pred_check_branch
          %274 = sbr.rel (%p272) target = $region40
        $region39: #{tpu_custom_call.1} parent=27 // pred_region
          %s276 = ssub.s32 384, 384
          %277 = vsyncadd %s268, %s276
          %s278 = smul.addr %s22, 3
          %s279 = smul.addr %s278, 128
          %s280 = scalar_lea.hbm %s2, %s279
          %s281 = sshll.u32 %s271, 4
          %s282 = int_to_ptr.vmem [resolvable:$true] %s281
          %287 = dma.vmem_to_hbm [thread:$0]  %s282, 384, %s280, %s268, 128, 128, 8
        $region40: #{tpu_custom_call.1} parent=27 // pred_fallthru
          _
      $region28: #{tpu_custom_call.1} parent=5 // pred_fallthru
        _
      %p288 = scmp.le.s32.totalorder 2, %s17
      // Predicated region
      $region41: #{tpu_custom_call.1} parent=5 // pred_check
        %p289 = pneg %p288
      $region42: #{tpu_custom_call.1} parent=5 // pred_check_branch
        %291 = sbr.rel (%p289) target = $region44
      $region43: #{tpu_custom_call.1} parent=5 // pred_region
        %s292 = ssub.s32 %s17, 2
        // Predicated region
        $region45: #{tpu_custom_call.1} parent=43 // pred_check
          %p293 = pneg %p98
        $region46: #{tpu_custom_call.1} parent=43 // pred_check_branch
          %295 = sbr.rel (%p293) target = $region48
        $region47: #{tpu_custom_call.1} parent=43 // pred_region
          %s296 = sand.u32 %s83, 1
          %s297 = scalar_lea.sflag [#allocation4], %s296
          %s298 = sand.u32 %s83, 1
          %s299 = smul.addr %s298, 24
          %s300 = scalar_lea.vmem [#allocation7], %s299
          %301 = dma.done %s297, 384
        $region48: #{tpu_custom_call.1} parent=43 // pred_fallthru
          _
      $region44: #{tpu_custom_call.1} parent=5 // pred_fallthru
        _
    $region6: #{tpu_custom_call.1} parent=1 // loop_footer
      %s21 = sadd.s32 1, %s17
    $region7: #{tpu_custom_call.1} parent=1 // loop_footer_branch
      %16 = sbr.rel target = $region3
    $region8: #{tpu_custom_call.1} parent=1 // loop_exit
      _
    %302 = vsyncpa [#allocation3], 1
    %s303 = scalar_lea.sflag [#allocation3], 1
    %304 = vsyncpa %s303, 1
    %305 = vsyncpa [#allocation6], 1
    %s306 = scalar_lea.sflag [#allocation6], 1
    %307 = vsyncpa %s306, 1
    %308 = vsyncpa [#allocation4], 1
    %s309 = scalar_lea.sflag [#allocation4], 1
    %310 = vsyncpa %s309, 1

</llo_original>
